<compile_context>
chip_gen: v7x
topology: tpu7x:2x2x1
jax: 0.10.0
libtpu: 0.0.40
codegen_flags: <defaults>
</compile_context>

<pallas_src>
import jax
import jax.numpy as jnp
from jax.experimental import pallas as pl
from jax.experimental.pallas import tpu as pltpu

MIN_VALUE = -4.2
MAX_VALUE = -2.3


def conv_transpose_kernel(x_ref, w_ref, b_ref, o_ref, xp_s):
    """Single invocation (no grid): whole problem in one block.

    x_ref : (N, C, H, W_in)  f32 VMEM   -- unpadded NCHW input
    w_ref : (C*K,)           f32 SMEM   -- flattened taps W[c, k] at c*K + k
    b_ref : (8,)             f32 SMEM   -- raw (unclamped) module bias
    o_ref : (N*H, W_out)     f32 VMEM   -- W_out = W_in + K - 1
    xp_s  : (C, N*H, WP)     f32 VMEM scratch, WP = W_in + 2*(K-1)
    """
    N, C, H, W_in = x_ref.shape
    NH, W_out = o_ref.shape
    K = W_out - W_in + 1

    # clamp_min then clamp_max on the bias (scalar path, done once).
    b0 = jnp.minimum(jnp.maximum(b_ref[0], MIN_VALUE), MAX_VALUE)

    # Fused zero-padding: build a channel-major, W-padded copy of x in VMEM.
    xp_s[...] = jnp.zeros_like(xp_s)
    for n in range(N):
        for c in range(C):
            xp_s[c, n * H:(n + 1) * H, K - 1:K - 1 + W_in] = x_ref[n, c, :, :]

    # Transposed conv along W (stride=1, pad=0):
    #   y[w] = sum_{c,k} x[c, w-k] * W[c, k]
    # With (K-1) zeros on both sides:  y[w] = sum_m xp[c, w+m] * W[c, K-1-m]
    acc = jnp.full((NH, W_out), b0, dtype=jnp.float32)
    for c in range(C):
        for m in range(K):
            tap = w_ref[c * K + (K - 1 - m)]               # scalar from SMEM
            acc = acc + xp_s[c, :, m:m + W_out] * tap      # VPU MAC
    o_ref[...] = acc.astype(o_ref.dtype)


def conv_transpose2d_model(x, weight_iohw, bias):
    """x: (N, C, H, W) f32;  weight_iohw: (Cin, Cout=1, kH=1, kW); bias: (8,)."""
    N, C, H, W_in = x.shape
    K = weight_iohw.shape[3]
    W_out = W_in + K - 1
    WP = W_in + 2 * (K - 1)

    # Tiny parameter reshuffle only (no activation-sized XLA ops).
    w_flat = weight_iohw[:, 0, 0, :].reshape(C * K)        # (C*K,)

    out2d = pl.pallas_call(
        conv_transpose_kernel,
        out_shape=jax.ShapeDtypeStruct((N * H, W_out), x.dtype),
        in_specs=[
            pl.BlockSpec(memory_space=pltpu.MemorySpace.VMEM),
            pl.BlockSpec(memory_space=pltpu.MemorySpace.SMEM),
            pl.BlockSpec(memory_space=pltpu.MemorySpace.SMEM),
        ],
        out_specs=pl.BlockSpec(memory_space=pltpu.MemorySpace.VMEM),
        scratch_shapes=[pltpu.VMEM((C, N * H, WP), jnp.float32)],
    )(x, w_flat, bias)

    # Metadata-only reshape back to NCHW (N, 1, H, W_out).
    return out2d.reshape(N, 1, H, W_out)


def _reference(x, weight_iohw, bias):
    """Independent scatter-form conv_transpose reference in plain JAX."""
    N, C, H, W_in = x.shape
    K = weight_iohw.shape[3]
    W_out = W_in + K - 1
    b0 = jnp.minimum(jnp.maximum(bias[0], MIN_VALUE), MAX_VALUE)
    y = jnp.full((N, 1, H, W_out), b0, dtype=jnp.float32)
    for c in range(C):
        for k in range(K):
            y = y.at[:, 0, :, k:k + W_in].add(x[:, c, :, :] * weight_iohw[c, 0, 0, k])
    return y


if __name__ == "__main__":
    key = jax.random.PRNGKey(0)
    kx, kw, kb = jax.random.split(key, 3)

    # Small shapes consistent with the module: N=2, C=3 (fixed by module), 16x16
    N, C, H, W = 2, 3, 16, 16
    x = jax.random.normal(kx, (N, C, H, W), dtype=jnp.float32)

    # Deterministic parameter init mirroring the module's construction:
    # ConvTranspose2d(3, 8, 1) weight (3, 8, 1, 1), then .transpose(1, 3).
    w_raw = 0.3 * jax.random.normal(kw, (3, 8, 1, 1), dtype=jnp.float32)
    weight = jnp.transpose(w_raw, (0, 3, 2, 1))          # (3, 1, 1, 8)
    bias = 0.5 * jax.random.normal(kb, (8,), dtype=jnp.float32)

    out = conv_transpose2d_model(x, weight, bias)
    out = jax.block_until_ready(out)

    ref = _reference(x, weight, bias)
    assert out.shape == (N, 1, H, W + 8 - 1), out.shape
    assert jnp.allclose(out, ref, atol=1e-5, rtol=1e-5), "mismatch vs reference"

    print("KERNEL_OK")
</pallas_src>

<mosaic_0001>
module attributes {stable_mosaic.version = 11 : i64} {
  func.func @conv_transpose_kernel(%arg0: memref<2x3x16x16xf32, #tpu.memory_space<vmem>>, %arg1: memref<24xf32, #tpu.memory_space<smem>>, %arg2: memref<8xf32, #tpu.memory_space<smem>>, %arg3: memref<32x23xf32, #tpu.memory_space<vmem>>, %arg4: memref<3x32x30xf32, #tpu.memory_space<vmem>>) attributes {dimension_semantics = [], scalar_prefetch = 0 : i64, scratch_operands = 1 : i64, tpu.core_type = #tpu.core_type<tc>} {
    %c0 = arith.constant 0 : index
    %0 = memref.load %arg2[%c0] : memref<8xf32, #tpu.memory_space<smem>>
    %cst = arith.constant -4.200000e+00 : f32
    %1 = arith.maximumf %0, %cst : f32
    %cst_0 = arith.constant -2.300000e+00 : f32
    %2 = arith.minimumf %1, %cst_0 : f32
    %cst_1 = arith.constant 0.000000e+00 : f32
    %3 = vector.broadcast %cst_1 : f32 to vector<3x32x30xf32>
    %c0_2 = arith.constant 0 : index
    %c0_3 = arith.constant 0 : index
    %c0_4 = arith.constant 0 : index
    %4 = vector.load %arg4[%c0_2, %c0_3, %c0_4] : memref<3x32x30xf32, #tpu.memory_space<vmem>>, vector<3x32x30xf32>
    tpu.vector_store %arg4[%c0_2, %c0_3, %c0_4], %3 {strides = array<i32>} : memref<3x32x30xf32, #tpu.memory_space<vmem>>, vector<3x32x30xf32>,
    %c0_5 = arith.constant 0 : index
    %c0_6 = arith.constant 0 : index
    %c0_7 = arith.constant 0 : index
    %c0_8 = arith.constant 0 : index
    %5 = vector.load %arg0[%c0_5, %c0_6, %c0_7, %c0_8] : memref<2x3x16x16xf32, #tpu.memory_space<vmem>>, vector<1x1x16x16xf32>
    %6 = vector.shape_cast %5 : vector<1x1x16x16xf32> to vector<16x16xf32>
    %c0_9 = arith.constant 0 : index
    %c0_10 = arith.constant 0 : index
    %c7 = arith.constant 7 : index
    %7 = vector.load %arg4[%c0_9, %c0_10, %c7] : memref<3x32x30xf32, #tpu.memory_space<vmem>>, vector<1x16x16xf32>
    %8 = vector.shape_cast %7 : vector<1x16x16xf32> to vector<16x16xf32>
    %9 = vector.shape_cast %6 : vector<16x16xf32> to vector<1x16x16xf32>
    tpu.vector_store %arg4[%c0_9, %c0_10, %c7], %9 {strides = array<i32>} : memref<3x32x30xf32, #tpu.memory_space<vmem>>, vector<1x16x16xf32>,
    %c0_11 = arith.constant 0 : index
    %c1 = arith.constant 1 : index
    %c0_12 = arith.constant 0 : index
    %c0_13 = arith.constant 0 : index
    %10 = vector.load %arg0[%c0_11, %c1, %c0_12, %c0_13] : memref<2x3x16x16xf32, #tpu.memory_space<vmem>>, vector<1x1x16x16xf32>
    %11 = vector.shape_cast %10 : vector<1x1x16x16xf32> to vector<16x16xf32>
    %c1_14 = arith.constant 1 : index
    %c0_15 = arith.constant 0 : index
    %c7_16 = arith.constant 7 : index
    %12 = vector.load %arg4[%c1_14, %c0_15, %c7_16] : memref<3x32x30xf32, #tpu.memory_space<vmem>>, vector<1x16x16xf32>
    %13 = vector.shape_cast %12 : vector<1x16x16xf32> to vector<16x16xf32>
    %14 = vector.shape_cast %11 : vector<16x16xf32> to vector<1x16x16xf32>
    tpu.vector_store %arg4[%c1_14, %c0_15, %c7_16], %14 {strides = array<i32>} : memref<3x32x30xf32, #tpu.memory_space<vmem>>, vector<1x16x16xf32>,
    %c0_17 = arith.constant 0 : index
    %c2 = arith.constant 2 : index
    %c0_18 = arith.constant 0 : index
    %c0_19 = arith.constant 0 : index
    %15 = vector.load %arg0[%c0_17, %c2, %c0_18, %c0_19] : memref<2x3x16x16xf32, #tpu.memory_space<vmem>>, vector<1x1x16x16xf32>
    %16 = vector.shape_cast %15 : vector<1x1x16x16xf32> to vector<16x16xf32>
    %c2_20 = arith.constant 2 : index
    %c0_21 = arith.constant 0 : index
    %c7_22 = arith.constant 7 : index
    %17 = vector.load %arg4[%c2_20, %c0_21, %c7_22] : memref<3x32x30xf32, #tpu.memory_space<vmem>>, vector<1x16x16xf32>
    %18 = vector.shape_cast %17 : vector<1x16x16xf32> to vector<16x16xf32>
    %19 = vector.shape_cast %16 : vector<16x16xf32> to vector<1x16x16xf32>
    tpu.vector_store %arg4[%c2_20, %c0_21, %c7_22], %19 {strides = array<i32>} : memref<3x32x30xf32, #tpu.memory_space<vmem>>, vector<1x16x16xf32>,
    %c1_23 = arith.constant 1 : index
    %c0_24 = arith.constant 0 : index
    %c0_25 = arith.constant 0 : index
    %c0_26 = arith.constant 0 : index
    %20 = vector.load %arg0[%c1_23, %c0_24, %c0_25, %c0_26] : memref<2x3x16x16xf32, #tpu.memory_space<vmem>>, vector<1x1x16x16xf32>
    %21 = vector.shape_cast %20 : vector<1x1x16x16xf32> to vector<16x16xf32>
    %c0_27 = arith.constant 0 : index
    %c16 = arith.constant 16 : index
    %c7_28 = arith.constant 7 : index
    %22 = vector.load %arg4[%c0_27, %c16, %c7_28] : memref<3x32x30xf32, #tpu.memory_space<vmem>>, vector<1x16x16xf32>
    %23 = vector.shape_cast %22 : vector<1x16x16xf32> to vector<16x16xf32>
    %24 = vector.shape_cast %21 : vector<16x16xf32> to vector<1x16x16xf32>
    tpu.vector_store %arg4[%c0_27, %c16, %c7_28], %24 {strides = array<i32>} : memref<3x32x30xf32, #tpu.memory_space<vmem>>, vector<1x16x16xf32>,
    %c1_29 = arith.constant 1 : index
    %c1_30 = arith.constant 1 : index
    %c0_31 = arith.constant 0 : index
    %c0_32 = arith.constant 0 : index
    %25 = vector.load %arg0[%c1_29, %c1_30, %c0_31, %c0_32] : memref<2x3x16x16xf32, #tpu.memory_space<vmem>>, vector<1x1x16x16xf32>
    %26 = vector.shape_cast %25 : vector<1x1x16x16xf32> to vector<16x16xf32>
    %c1_33 = arith.constant 1 : index
    %c16_34 = arith.constant 16 : index
    %c7_35 = arith.constant 7 : index
    %27 = vector.load %arg4[%c1_33, %c16_34, %c7_35] : memref<3x32x30xf32, #tpu.memory_space<vmem>>, vector<1x16x16xf32>
    %28 = vector.shape_cast %27 : vector<1x16x16xf32> to vector<16x16xf32>
    %29 = vector.shape_cast %26 : vector<16x16xf32> to vector<1x16x16xf32>
    tpu.vector_store %arg4[%c1_33, %c16_34, %c7_35], %29 {strides = array<i32>} : memref<3x32x30xf32, #tpu.memory_space<vmem>>, vector<1x16x16xf32>,
    %c1_36 = arith.constant 1 : index
    %c2_37 = arith.constant 2 : index
    %c0_38 = arith.constant 0 : index
    %c0_39 = arith.constant 0 : index
    %30 = vector.load %arg0[%c1_36, %c2_37, %c0_38, %c0_39] : memref<2x3x16x16xf32, #tpu.memory_space<vmem>>, vector<1x1x16x16xf32>
    %31 = vector.shape_cast %30 : vector<1x1x16x16xf32> to vector<16x16xf32>
    %c2_40 = arith.constant 2 : index
    %c16_41 = arith.constant 16 : index
    %c7_42 = arith.constant 7 : index
    %32 = vector.load %arg4[%c2_40, %c16_41, %c7_42] : memref<3x32x30xf32, #tpu.memory_space<vmem>>, vector<1x16x16xf32>
    %33 = vector.shape_cast %32 : vector<1x16x16xf32> to vector<16x16xf32>
    %34 = vector.shape_cast %31 : vector<16x16xf32> to vector<1x16x16xf32>
    tpu.vector_store %arg4[%c2_40, %c16_41, %c7_42], %34 {strides = array<i32>} : memref<3x32x30xf32, #tpu.memory_space<vmem>>, vector<1x16x16xf32>,
    %35 = vector.broadcast %2 : f32 to vector<32x23xf32>
    %c7_43 = arith.constant 7 : index
    %36 = memref.load %arg1[%c7_43] : memref<24xf32, #tpu.memory_space<smem>>
    %c0_44 = arith.constant 0 : index
    %c0_45 = arith.constant 0 : index
    %c0_46 = arith.constant 0 : index
    %37 = vector.load %arg4[%c0_44, %c0_45, %c0_46] : memref<3x32x30xf32, #tpu.memory_space<vmem>>, vector<1x32x23xf32>
    %38 = vector.shape_cast %37 : vector<1x32x23xf32> to vector<32x23xf32>
    %39 = vector.broadcast %36 : f32 to vector<32x23xf32>
    %40 = arith.mulf %38, %39 : vector<32x23xf32>
    %41 = arith.addf %35, %40 : vector<32x23xf32>
    %c6 = arith.constant 6 : index
    %42 = memref.load %arg1[%c6] : memref<24xf32, #tpu.memory_space<smem>>
    %c0_47 = arith.constant 0 : index
    %c0_48 = arith.constant 0 : index
    %c1_49 = arith.constant 1 : index
    %43 = vector.load %arg4[%c0_47, %c0_48, %c1_49] : memref<3x32x30xf32, #tpu.memory_space<vmem>>, vector<1x32x23xf32>
    %44 = vector.shape_cast %43 : vector<1x32x23xf32> to vector<32x23xf32>
    %45 = vector.broadcast %42 : f32 to vector<32x23xf32>
    %46 = arith.mulf %44, %45 : vector<32x23xf32>
    %47 = arith.addf %41, %46 : vector<32x23xf32>
    %c5 = arith.constant 5 : index
    %48 = memref.load %arg1[%c5] : memref<24xf32, #tpu.memory_space<smem>>
    %c0_50 = arith.constant 0 : index
    %c0_51 = arith.constant 0 : index
    %c2_52 = arith.constant 2 : index
    %49 = vector.load %arg4[%c0_50, %c0_51, %c2_52] : memref<3x32x30xf32, #tpu.memory_space<vmem>>, vector<1x32x23xf32>
    %50 = vector.shape_cast %49 : vector<1x32x23xf32> to vector<32x23xf32>
    %51 = vector.broadcast %48 : f32 to vector<32x23xf32>
    %52 = arith.mulf %50, %51 : vector<32x23xf32>
    %53 = arith.addf %47, %52 : vector<32x23xf32>
    %c4 = arith.constant 4 : index
    %54 = memref.load %arg1[%c4] : memref<24xf32, #tpu.memory_space<smem>>
    %c0_53 = arith.constant 0 : index
    %c0_54 = arith.constant 0 : index
    %c3 = arith.constant 3 : index
    %55 = vector.load %arg4[%c0_53, %c0_54, %c3] : memref<3x32x30xf32, #tpu.memory_space<vmem>>, vector<1x32x23xf32>
    %56 = vector.shape_cast %55 : vector<1x32x23xf32> to vector<32x23xf32>
    %57 = vector.broadcast %54 : f32 to vector<32x23xf32>
    %58 = arith.mulf %56, %57 : vector<32x23xf32>
    %59 = arith.addf %53, %58 : vector<32x23xf32>
    %c3_55 = arith.constant 3 : index
    %60 = memref.load %arg1[%c3_55] : memref<24xf32, #tpu.memory_space<smem>>
    %c0_56 = arith.constant 0 : index
    %c0_57 = arith.constant 0 : index
    %c4_58 = arith.constant 4 : index
    %61 = vector.load %arg4[%c0_56, %c0_57, %c4_58] : memref<3x32x30xf32, #tpu.memory_space<vmem>>, vector<1x32x23xf32>
    %62 = vector.shape_cast %61 : vector<1x32x23xf32> to vector<32x23xf32>
    %63 = vector.broadcast %60 : f32 to vector<32x23xf32>
    %64 = arith.mulf %62, %63 : vector<32x23xf32>
    %65 = arith.addf %59, %64 : vector<32x23xf32>
    %c2_59 = arith.constant 2 : index
    %66 = memref.load %arg1[%c2_59] : memref<24xf32, #tpu.memory_space<smem>>
    %c0_60 = arith.constant 0 : index
    %c0_61 = arith.constant 0 : index
    %c5_62 = arith.constant 5 : index
    %67 = vector.load %arg4[%c0_60, %c0_61, %c5_62] : memref<3x32x30xf32, #tpu.memory_space<vmem>>, vector<1x32x23xf32>
    %68 = vector.shape_cast %67 : vector<1x32x23xf32> to vector<32x23xf32>
    %69 = vector.broadcast %66 : f32 to vector<32x23xf32>
    %70 = arith.mulf %68, %69 : vector<32x23xf32>
    %71 = arith.addf %65, %70 : vector<32x23xf32>
    %c1_63 = arith.constant 1 : index
    %72 = memref.load %arg1[%c1_63] : memref<24xf32, #tpu.memory_space<smem>>
    %c0_64 = arith.constant 0 : index
    %c0_65 = arith.constant 0 : index
    %c6_66 = arith.constant 6 : index
    %73 = vector.load %arg4[%c0_64, %c0_65, %c6_66] : memref<3x32x30xf32, #tpu.memory_space<vmem>>, vector<1x32x23xf32>
    %74 = vector.shape_cast %73 : vector<1x32x23xf32> to vector<32x23xf32>
    %75 = vector.broadcast %72 : f32 to vector<32x23xf32>
    %76 = arith.mulf %74, %75 : vector<32x23xf32>
    %77 = arith.addf %71, %76 : vector<32x23xf32>
    %c0_67 = arith.constant 0 : index
    %78 = memref.load %arg1[%c0_67] : memref<24xf32, #tpu.memory_space<smem>>
    %c0_68 = arith.constant 0 : index
    %c0_69 = arith.constant 0 : index
    %c7_70 = arith.constant 7 : index
    %79 = vector.load %arg4[%c0_68, %c0_69, %c7_70] : memref<3x32x30xf32, #tpu.memory_space<vmem>>, vector<1x32x23xf32>
    %80 = vector.shape_cast %79 : vector<1x32x23xf32> to vector<32x23xf32>
    %81 = vector.broadcast %78 : f32 to vector<32x23xf32>
    %82 = arith.mulf %80, %81 : vector<32x23xf32>
    %83 = arith.addf %77, %82 : vector<32x23xf32>
    %c15 = arith.constant 15 : index
    %84 = memref.load %arg1[%c15] : memref<24xf32, #tpu.memory_space<smem>>
    %c1_71 = arith.constant 1 : index
    %c0_72 = arith.constant 0 : index
    %c0_73 = arith.constant 0 : index
    %85 = vector.load %arg4[%c1_71, %c0_72, %c0_73] : memref<3x32x30xf32, #tpu.memory_space<vmem>>, vector<1x32x23xf32>
    %86 = vector.shape_cast %85 : vector<1x32x23xf32> to vector<32x23xf32>
    %87 = vector.broadcast %84 : f32 to vector<32x23xf32>
    %88 = arith.mulf %86, %87 : vector<32x23xf32>
    %89 = arith.addf %83, %88 : vector<32x23xf32>
    %c14 = arith.constant 14 : index
    %90 = memref.load %arg1[%c14] : memref<24xf32, #tpu.memory_space<smem>>
    %c1_74 = arith.constant 1 : index
    %c0_75 = arith.constant 0 : index
    %c1_76 = arith.constant 1 : index
    %91 = vector.load %arg4[%c1_74, %c0_75, %c1_76] : memref<3x32x30xf32, #tpu.memory_space<vmem>>, vector<1x32x23xf32>
    %92 = vector.shape_cast %91 : vector<1x32x23xf32> to vector<32x23xf32>
    %93 = vector.broadcast %90 : f32 to vector<32x23xf32>
    %94 = arith.mulf %92, %93 : vector<32x23xf32>
    %95 = arith.addf %89, %94 : vector<32x23xf32>
    %c13 = arith.constant 13 : index
    %96 = memref.load %arg1[%c13] : memref<24xf32, #tpu.memory_space<smem>>
    %c1_77 = arith.constant 1 : index
    %c0_78 = arith.constant 0 : index
    %c2_79 = arith.constant 2 : index
    %97 = vector.load %arg4[%c1_77, %c0_78, %c2_79] : memref<3x32x30xf32, #tpu.memory_space<vmem>>, vector<1x32x23xf32>
    %98 = vector.shape_cast %97 : vector<1x32x23xf32> to vector<32x23xf32>
    %99 = vector.broadcast %96 : f32 to vector<32x23xf32>
    %100 = arith.mulf %98, %99 : vector<32x23xf32>
    %101 = arith.addf %95, %100 : vector<32x23xf32>
    %c12 = arith.constant 12 : index
    %102 = memref.load %arg1[%c12] : memref<24xf32, #tpu.memory_space<smem>>
    %c1_80 = arith.constant 1 : index
    %c0_81 = arith.constant 0 : index
    %c3_82 = arith.constant 3 : index
    %103 = vector.load %arg4[%c1_80, %c0_81, %c3_82] : memref<3x32x30xf32, #tpu.memory_space<vmem>>, vector<1x32x23xf32>
    %104 = vector.shape_cast %103 : vector<1x32x23xf32> to vector<32x23xf32>
    %105 = vector.broadcast %102 : f32 to vector<32x23xf32>
    %106 = arith.mulf %104, %105 : vector<32x23xf32>
    %107 = arith.addf %101, %106 : vector<32x23xf32>
    %c11 = arith.constant 11 : index
    %108 = memref.load %arg1[%c11] : memref<24xf32, #tpu.memory_space<smem>>
    %c1_83 = arith.constant 1 : index
    %c0_84 = arith.constant 0 : index
    %c4_85 = arith.constant 4 : index
    %109 = vector.load %arg4[%c1_83, %c0_84, %c4_85] : memref<3x32x30xf32, #tpu.memory_space<vmem>>, vector<1x32x23xf32>
    %110 = vector.shape_cast %109 : vector<1x32x23xf32> to vector<32x23xf32>
    %111 = vector.broadcast %108 : f32 to vector<32x23xf32>
    %112 = arith.mulf %110, %111 : vector<32x23xf32>
    %113 = arith.addf %107, %112 : vector<32x23xf32>
    %c10 = arith.constant 10 : index
    %114 = memref.load %arg1[%c10] : memref<24xf32, #tpu.memory_space<smem>>
    %c1_86 = arith.constant 1 : index
    %c0_87 = arith.constant 0 : index
    %c5_88 = arith.constant 5 : index
    %115 = vector.load %arg4[%c1_86, %c0_87, %c5_88] : memref<3x32x30xf32, #tpu.memory_space<vmem>>, vector<1x32x23xf32>
    %116 = vector.shape_cast %115 : vector<1x32x23xf32> to vector<32x23xf32>
    %117 = vector.broadcast %114 : f32 to vector<32x23xf32>
    %118 = arith.mulf %116, %117 : vector<32x23xf32>
    %119 = arith.addf %113, %118 : vector<32x23xf32>
    %c9 = arith.constant 9 : index
    %120 = memref.load %arg1[%c9] : memref<24xf32, #tpu.memory_space<smem>>
    %c1_89 = arith.constant 1 : index
    %c0_90 = arith.constant 0 : index
    %c6_91 = arith.constant 6 : index
    %121 = vector.load %arg4[%c1_89, %c0_90, %c6_91] : memref<3x32x30xf32, #tpu.memory_space<vmem>>, vector<1x32x23xf32>
    %122 = vector.shape_cast %121 : vector<1x32x23xf32> to vector<32x23xf32>
    %123 = vector.broadcast %120 : f32 to vector<32x23xf32>
    %124 = arith.mulf %122, %123 : vector<32x23xf32>
    %125 = arith.addf %119, %124 : vector<32x23xf32>
    %c8 = arith.constant 8 : index
    %126 = memref.load %arg1[%c8] : memref<24xf32, #tpu.memory_space<smem>>
    %c1_92 = arith.constant 1 : index
    %c0_93 = arith.constant 0 : index
    %c7_94 = arith.constant 7 : index
    %127 = vector.load %arg4[%c1_92, %c0_93, %c7_94] : memref<3x32x30xf32, #tpu.memory_space<vmem>>, vector<1x32x23xf32>
    %128 = vector.shape_cast %127 : vector<1x32x23xf32> to vector<32x23xf32>
    %129 = vector.broadcast %126 : f32 to vector<32x23xf32>
    %130 = arith.mulf %128, %129 : vector<32x23xf32>
    %131 = arith.addf %125, %130 : vector<32x23xf32>
    %c23 = arith.constant 23 : index
    %132 = memref.load %arg1[%c23] : memref<24xf32, #tpu.memory_space<smem>>
    %c2_95 = arith.constant 2 : index
    %c0_96 = arith.constant 0 : index
    %c0_97 = arith.constant 0 : index
    %133 = vector.load %arg4[%c2_95, %c0_96, %c0_97] : memref<3x32x30xf32, #tpu.memory_space<vmem>>, vector<1x32x23xf32>
    %134 = vector.shape_cast %133 : vector<1x32x23xf32> to vector<32x23xf32>
    %135 = vector.broadcast %132 : f32 to vector<32x23xf32>
    %136 = arith.mulf %134, %135 : vector<32x23xf32>
    %137 = arith.addf %131, %136 : vector<32x23xf32>
    %c22 = arith.constant 22 : index
    %138 = memref.load %arg1[%c22] : memref<24xf32, #tpu.memory_space<smem>>
    %c2_98 = arith.constant 2 : index
    %c0_99 = arith.constant 0 : index
    %c1_100 = arith.constant 1 : index
    %139 = vector.load %arg4[%c2_98, %c0_99, %c1_100] : memref<3x32x30xf32, #tpu.memory_space<vmem>>, vector<1x32x23xf32>
    %140 = vector.shape_cast %139 : vector<1x32x23xf32> to vector<32x23xf32>
    %141 = vector.broadcast %138 : f32 to vector<32x23xf32>
    %142 = arith.mulf %140, %141 : vector<32x23xf32>
    %143 = arith.addf %137, %142 : vector<32x23xf32>
    %c21 = arith.constant 21 : index
    %144 = memref.load %arg1[%c21] : memref<24xf32, #tpu.memory_space<smem>>
    %c2_101 = arith.constant 2 : index
    %c0_102 = arith.constant 0 : index
    %c2_103 = arith.constant 2 : index
    %145 = vector.load %arg4[%c2_101, %c0_102, %c2_103] : memref<3x32x30xf32, #tpu.memory_space<vmem>>, vector<1x32x23xf32>
    %146 = vector.shape_cast %145 : vector<1x32x23xf32> to vector<32x23xf32>
    %147 = vector.broadcast %144 : f32 to vector<32x23xf32>
    %148 = arith.mulf %146, %147 : vector<32x23xf32>
    %149 = arith.addf %143, %148 : vector<32x23xf32>
    %c20 = arith.constant 20 : index
    %150 = memref.load %arg1[%c20] : memref<24xf32, #tpu.memory_space<smem>>
    %c2_104 = arith.constant 2 : index
    %c0_105 = arith.constant 0 : index
    %c3_106 = arith.constant 3 : index
    %151 = vector.load %arg4[%c2_104, %c0_105, %c3_106] : memref<3x32x30xf32, #tpu.memory_space<vmem>>, vector<1x32x23xf32>
    %152 = vector.shape_cast %151 : vector<1x32x23xf32> to vector<32x23xf32>
    %153 = vector.broadcast %150 : f32 to vector<32x23xf32>
    %154 = arith.mulf %152, %153 : vector<32x23xf32>
    %155 = arith.addf %149, %154 : vector<32x23xf32>
    %c19 = arith.constant 19 : index
    %156 = memref.load %arg1[%c19] : memref<24xf32, #tpu.memory_space<smem>>
    %c2_107 = arith.constant 2 : index
    %c0_108 = arith.constant 0 : index
    %c4_109 = arith.constant 4 : index
    %157 = vector.load %arg4[%c2_107, %c0_108, %c4_109] : memref<3x32x30xf32, #tpu.memory_space<vmem>>, vector<1x32x23xf32>
    %158 = vector.shape_cast %157 : vector<1x32x23xf32> to vector<32x23xf32>
    %159 = vector.broadcast %156 : f32 to vector<32x23xf32>
    %160 = arith.mulf %158, %159 : vector<32x23xf32>
    %161 = arith.addf %155, %160 : vector<32x23xf32>
    %c18 = arith.constant 18 : index
    %162 = memref.load %arg1[%c18] : memref<24xf32, #tpu.memory_space<smem>>
    %c2_110 = arith.constant 2 : index
    %c0_111 = arith.constant 0 : index
    %c5_112 = arith.constant 5 : index
    %163 = vector.load %arg4[%c2_110, %c0_111, %c5_112] : memref<3x32x30xf32, #tpu.memory_space<vmem>>, vector<1x32x23xf32>
    %164 = vector.shape_cast %163 : vector<1x32x23xf32> to vector<32x23xf32>
    %165 = vector.broadcast %162 : f32 to vector<32x23xf32>
    %166 = arith.mulf %164, %165 : vector<32x23xf32>
    %167 = arith.addf %161, %166 : vector<32x23xf32>
    %c17 = arith.constant 17 : index
    %168 = memref.load %arg1[%c17] : memref<24xf32, #tpu.memory_space<smem>>
    %c2_113 = arith.constant 2 : index
    %c0_114 = arith.constant 0 : index
    %c6_115 = arith.constant 6 : index
    %169 = vector.load %arg4[%c2_113, %c0_114, %c6_115] : memref<3x32x30xf32, #tpu.memory_space<vmem>>, vector<1x32x23xf32>
    %170 = vector.shape_cast %169 : vector<1x32x23xf32> to vector<32x23xf32>
    %171 = vector.broadcast %168 : f32 to vector<32x23xf32>
    %172 = arith.mulf %170, %171 : vector<32x23xf32>
    %173 = arith.addf %167, %172 : vector<32x23xf32>
    %c16_116 = arith.constant 16 : index
    %174 = memref.load %arg1[%c16_116] : memref<24xf32, #tpu.memory_space<smem>>
    %c2_117 = arith.constant 2 : index
    %c0_118 = arith.constant 0 : index
    %c7_119 = arith.constant 7 : index
    %175 = vector.load %arg4[%c2_117, %c0_118, %c7_119] : memref<3x32x30xf32, #tpu.memory_space<vmem>>, vector<1x32x23xf32>
    %176 = vector.shape_cast %175 : vector<1x32x23xf32> to vector<32x23xf32>
    %177 = vector.broadcast %174 : f32 to vector<32x23xf32>
    %178 = arith.mulf %176, %177 : vector<32x23xf32>
    %179 = arith.addf %173, %178 : vector<32x23xf32>
    %c0_120 = arith.constant 0 : index
    %c0_121 = arith.constant 0 : index
    %180 = vector.load %arg3[%c0_120, %c0_121] : memref<32x23xf32, #tpu.memory_space<vmem>>, vector<32x23xf32>
    tpu.vector_store %arg3[%c0_120, %c0_121], %179 {strides = array<i32>} : memref<32x23xf32, #tpu.memory_space<vmem>>, vector<32x23xf32>,
    return
  }
}

</mosaic_0001>

<llo_original>
// kernel: tpu_custom_call.1
$region0: #{tpu_custom_call.1}
  #allocation0 [shape = 'u32[]', space=smem, size = 0x4, offset = 0x4, fixed_abs, tag = 'smem constant byte address 0x4 - core index']
  #allocation1 [shape = 'u32[144,128]{1,0:T(1,128)}', space=vmem, size = 0x12000, scoped, tag = 'internal scratch']
  #allocation2 [shape = 'f32[3,32,30]{2,1,0:T(8,128)}', space=vmem, size = 0xc000, scoped, tag = 'scratch operand']
  %s0 = inlined_call_operand.hbm [shape: f32[2,3,16,16], index: 0, kind: input, shape index: {}]
  %s1 = inlined_call_operand.vmem [shape: f32[24], index: 1, kind: input, shape index: {}]
  %s2 = inlined_call_operand.vmem [shape: f32[8], index: 2, kind: input, shape index: {}]
  %s3 = inlined_call_operand.vmem [shape: f32[32,23], index: 3, kind: output, shape index: {}]
  %s4 = sld [smem:[#allocation0]]
  $region34: #{tpu_custom_call.1} parent=0
    _
  %s6 = ssub.s32 1, %s4
  %s7 = scalar_select 0, %s6, %s4
  $region1: #{tpu_custom_call.1} parent=0
    #allocation3 [shape = 'u8[49152]{0}', space=vmem, size = 0xc000, scoped, tag = 'input window, operand 0, single buffered']
    #allocation4 [shape = 's32[1]{0}', space=sflag, size = 0x4, scoped, tag = 'scoped memory for tpu_custom_call.1']
    #allocation5 [shape = 's32[1]{0}', space=sflag, size = 0x4, scoped, tag = 'scoped memory for tpu_custom_call.1']
    #allocation6 [shape = 'u8[512]{0}', space=smem, size = 0x200, scoped, tag = 'input window, operand 1, single buffered']
    #allocation7 [shape = 'u8[512]{0}', space=smem, size = 0x200, scoped, tag = 'input window, operand 2, single buffered']
    #allocation8 [shape = 's32[1]{0}', space=sflag, size = 0x4, scoped, tag = 'scoped memory for tpu_custom_call.1']
    %8 = vsyncpa [#allocation4], 0
    %9 = vsyncpa [#allocation5], 0
    %10 = vsyncpa [#allocation8], 0
    // Predicated region
    $region2: #{tpu_custom_call.1} parent=1 // pred_check
      _
    $region3: #{tpu_custom_call.1} parent=1 // pred_check_branch
      %12 = sbr.rel (0) target = $region5
    $region4: #{tpu_custom_call.1} parent=1 // pred_region
      %s14 = ssub.s32 1536, 1536
      %15 = vsyncadd [#allocation4], %s14
      %s16 = sshll.u32 [#allocation3], 4
      %s17 = int_to_ptr.vmem [resolvable:$true] %s16
      %22 = dma.hbm_to_vmem [thread:$0]  %s0, 1536, %s17, [#allocation4], 128, 128, 8
    $region5: #{tpu_custom_call.1} parent=1 // pred_fallthru
      _
    // Predicated region
    $region6: #{tpu_custom_call.1} parent=1 // pred_check
      _
    $region7: #{tpu_custom_call.1} parent=1 // pred_check_branch
      %24 = sbr.rel (0) target = $region9
    $region8: #{tpu_custom_call.1} parent=1 // pred_region
      %s26 = ssub.s32 16, 16
      %27 = vsyncadd [#allocation5], %s26
      %s29 = sshll.u32 %s1, 4
      %s30 = int_to_ptr.vmem [resolvable:$true] %s29
      %32 = dma.vmem_to_smem %s30, 16, [#allocation6], [#allocation5]
    $region9: #{tpu_custom_call.1} parent=1 // pred_fallthru
      _
    // Predicated region
    $region10: #{tpu_custom_call.1} parent=1 // pred_check
      _
    $region11: #{tpu_custom_call.1} parent=1 // pred_check_branch
      %34 = sbr.rel (0) target = $region13
    $region12: #{tpu_custom_call.1} parent=1 // pred_region
      %s36 = ssub.s32 16, 16
      %37 = vsyncadd [#allocation8], %s36
      %s39 = sshll.u32 %s2, 4
      %s40 = int_to_ptr.vmem [resolvable:$true] %s39
      %42 = dma.vmem_to_smem %s40, 16, [#allocation7], [#allocation8]
    $region13: #{tpu_custom_call.1} parent=1 // pred_fallthru
      _
    // Predicated region
    $region14: #{tpu_custom_call.1} parent=1 // pred_check
      _
    $region15: #{tpu_custom_call.1} parent=1 // pred_check_branch
      %44 = sbr.rel (0) target = $region17
    $region16: #{tpu_custom_call.1} parent=1 // pred_region
      %45 = dma.done [#allocation4], 1536
    $region17: #{tpu_custom_call.1} parent=1 // pred_fallthru
      _
    // Predicated region
    $region18: #{tpu_custom_call.1} parent=1 // pred_check
      _
    $region19: #{tpu_custom_call.1} parent=1 // pred_check_branch
      %47 = sbr.rel (0) target = $region21
    $region20: #{tpu_custom_call.1} parent=1 // pred_region
      %48 = dma.done [#allocation5], 16
    $region21: #{tpu_custom_call.1} parent=1 // pred_fallthru
      _
    // Predicated region
    $region22: #{tpu_custom_call.1} parent=1 // pred_check
      _
    $region23: #{tpu_custom_call.1} parent=1 // pred_check_branch
      %50 = sbr.rel (0) target = $region25
    $region24: #{tpu_custom_call.1} parent=1 // pred_region
      %51 = dma.done [#allocation8], 16
    $region25: #{tpu_custom_call.1} parent=1 // pred_fallthru
      _
    %52 = sfence
    %s53 = sld [smem:[#allocation7]]
    %s54 = smax.f32 %s53, -4.2
    %s55 = smin.f32 %s54, -2.3
    %vm56 = vcmask 244736
    %57 = vst.msk [vmem:[#allocation2] sm:$0xff] %vm56, 0.0
    %58 = vst.msk [vmem:[#allocation2 + $0x8] sm:$0xff] %vm56, 0.0
    %59 = vst.msk [vmem:[#allocation2 + $0x10] sm:$0xff] %vm56, 0.0
    %60 = vst.msk [vmem:[#allocation2 + $0x18] sm:$0xff] %vm56, 0.0
    %61 = vst.msk [vmem:[#allocation2 + $0x20] sm:$0xff] %vm56, 0.0
    %62 = vst.msk [vmem:[#allocation2 + $0x28] sm:$0xff] %vm56, 0.0
    %63 = vst.msk [vmem:[#allocation2 + $0x30] sm:$0xff] %vm56, 0.0
    %64 = vst.msk [vmem:[#allocation2 + $0x38] sm:$0xff] %vm56, 0.0
    %65 = vst.msk [vmem:[#allocation2 + $0x40] sm:$0xff] %vm56, 0.0
    %66 = vst.msk [vmem:[#allocation2 + $0x48] sm:$0xff] %vm56, 0.0
    %67 = vst.msk [vmem:[#allocation2 + $0x50] sm:$0xff] %vm56, 0.0
    %68 = vst.msk [vmem:[#allocation2 + $0x58] sm:$0xff] %vm56, 0.0
    %v69 = vld [vmem:[#allocation3] sm:$0xff]
    %v70 = vld [vmem:[#allocation3 + $0x8] sm:$0xff]
    %73 = vrot.lane.b32.xlu0 %v69, 7
    %v74 = vpop.permute.xlu0 %73
    %75 = vrot.lane.b32.xlu0 %v70, 7
    %v76 = vpop.permute.xlu0 %75
    %vm79 = vcmask 187448
    %80 = vst.msk [vmem:[#allocation2] sm:$0xff] %vm79, %v74
    %81 = vst.msk [vmem:[#allocation2 + $0x8] sm:$0xff] %vm79, %v76
    %s82 = scalar_lea.vmem [#allocation3], 16
    %v83 = vld [vmem:[%s82] sm:$0xff]
    %v84 = vld [vmem:[%s82 + $0x8] sm:$0xff]
    %87 = vrot.lane.b32.xlu0 %v83, 7
    %v88 = vpop.permute.xlu0 %87
    %89 = vrot.lane.b32.xlu0 %v84, 7
    %v90 = vpop.permute.xlu0 %89
    %s93 = scalar_lea.vmem [#allocation2], 32
    %94 = vst.msk [vmem:[%s93] sm:$0xff] %vm79, %v88
    %95 = vst.msk [vmem:[%s93 + $0x8] sm:$0xff] %vm79, %v90
    %s96 = scalar_lea.vmem [#allocation3], 32
    %v97 = vld [vmem:[%s96] sm:$0xff]
    %v98 = vld [vmem:[%s96 + $0x8] sm:$0xff]
    %101 = vrot.lane.b32.xlu0 %v97, 7
    %v102 = vpop.permute.xlu0 %101
    %103 = vrot.lane.b32.xlu0 %v98, 7
    %v104 = vpop.permute.xlu0 %103
    %s107 = scalar_lea.vmem [#allocation2], 64
    %108 = vst.msk [vmem:[%s107] sm:$0xff] %vm79, %v102
    %109 = vst.msk [vmem:[%s107 + $0x8] sm:$0xff] %vm79, %v104
    %s110 = scalar_lea.vmem [#allocation3], 48
    %v111 = vld [vmem:[%s110] sm:$0xff]
    %v112 = vld [vmem:[%s110 + $0x8] sm:$0xff]
    %115 = vrot.lane.b32.xlu0 %v111, 7
    %v116 = vpop.permute.xlu0 %115
    %117 = vrot.lane.b32.xlu0 %v112, 7
    %v118 = vpop.permute.xlu0 %117
    %121 = vst.msk [vmem:[#allocation2 + $0x10] sm:$0xff] %vm79, %v116
    %122 = vst.msk [vmem:[#allocation2 + $0x18] sm:$0xff] %vm79, %v118
    %s123 = scalar_lea.vmem [#allocation3], 64
    %v124 = vld [vmem:[%s123] sm:$0xff]
    %v125 = vld [vmem:[%s123 + $0x8] sm:$0xff]
    %128 = vrot.lane.b32.xlu0 %v124, 7
    %v129 = vpop.permute.xlu0 %128
    %130 = vrot.lane.b32.xlu0 %v125, 7
    %v131 = vpop.permute.xlu0 %130
    %134 = vst.msk [vmem:[%s93 + $0x10] sm:$0xff] %vm79, %v129
    %135 = vst.msk [vmem:[%s93 + $0x18] sm:$0xff] %vm79, %v131
    %s136 = scalar_lea.vmem [#allocation3], 80
    %v137 = vld [vmem:[%s136] sm:$0xff]
    %v138 = vld [vmem:[%s136 + $0x8] sm:$0xff]
    %141 = vrot.lane.b32.xlu0 %v137, 7
    %v142 = vpop.permute.xlu0 %141
    %143 = vrot.lane.b32.xlu0 %v138, 7
    %v144 = vpop.permute.xlu0 %143
    %147 = vst.msk [vmem:[%s107 + $0x10] sm:$0xff] %vm79, %v142
    %148 = vst.msk [vmem:[%s107 + $0x18] sm:$0xff] %vm79, %v144
    %v149 = vstv %s55
    %s150 = sld [smem:[#allocation6 + $0x7]]
    %v151 = vld [vmem:[#allocation2] sm:$0xff]
    %v152 = vld [vmem:[#allocation2 + $0x8] sm:$0xff]
    %v153 = vld [vmem:[#allocation2 + $0x10] sm:$0xff]
    %v154 = vld [vmem:[#allocation2 + $0x18] sm:$0xff]
    %v155 = vstv %s150
    %v156 = vmul.f32 %v151, %v155
    %v157 = vmul.f32 %v152, %v155
    %v158 = vmul.f32 %v153, %v155
    %v159 = vmul.f32 %v154, %v155
    %v160 = vadd.f32 %v149, %v156
    %v161 = vadd.f32 %v149, %v157
    %v162 = vadd.f32 %v149, %v158
    %v163 = vadd.f32 %v149, %v159
    %s164 = sld [smem:[#allocation6 + $0x6]]
    %v165 = vstv %s164
    %v166 = vmul.f32 %v151, %v165
    %v167 = vmul.f32 %v152, %v165
    %v168 = vmul.f32 %v153, %v165
    %v169 = vmul.f32 %v154, %v165
    %174 = vrot.lane.b32.xlu0 %v166, 127
    %v175 = vpop.permute.xlu0 %174
    %176 = vrot.lane.b32.xlu0 %v167, 127
    %v177 = vpop.permute.xlu0 %176
    %178 = vrot.lane.b32.xlu0 %v168, 127
    %v179 = vpop.permute.xlu0 %178
    %180 = vrot.lane.b32.xlu0 %v169, 127
    %v181 = vpop.permute.xlu0 %180
    %v186 = vadd.f32 %v160, %v175
    %v187 = vadd.f32 %v161, %v177
    %v188 = vadd.f32 %v162, %v179
    %v189 = vadd.f32 %v163, %v181
    %s190 = sld [smem:[#allocation6 + $0x5]]
    %v191 = vstv %s190
    %v192 = vmul.f32 %v151, %v191
    %v193 = vmul.f32 %v152, %v191
    %v194 = vmul.f32 %v153, %v191
    %v195 = vmul.f32 %v154, %v191
    %200 = vrot.lane.b32.xlu0 %v192, 126
    %v201 = vpop.permute.xlu0 %200
    %202 = vrot.lane.b32.xlu0 %v193, 126
    %v203 = vpop.permute.xlu0 %202
    %204 = vrot.lane.b32.xlu0 %v194, 126
    %v205 = vpop.permute.xlu0 %204
    %206 = vrot.lane.b32.xlu0 %v195, 126
    %v207 = vpop.permute.xlu0 %206
    %v212 = vadd.f32 %v186, %v201
    %v213 = vadd.f32 %v187, %v203
    %v214 = vadd.f32 %v188, %v205
    %v215 = vadd.f32 %v189, %v207
    %s216 = sld [smem:[#allocation6 + $0x4]]
    %v217 = vstv %s216
    %v218 = vmul.f32 %v151, %v217
    %v219 = vmul.f32 %v152, %v217
    %v220 = vmul.f32 %v153, %v217
    %v221 = vmul.f32 %v154, %v217
    %226 = vrot.lane.b32.xlu0 %v218, 125
    %v227 = vpop.permute.xlu0 %226
    %228 = vrot.lane.b32.xlu0 %v219, 125
    %v229 = vpop.permute.xlu0 %228
    %230 = vrot.lane.b32.xlu0 %v220, 125
    %v231 = vpop.permute.xlu0 %230
    %232 = vrot.lane.b32.xlu0 %v221, 125
    %v233 = vpop.permute.xlu0 %232
    %v238 = vadd.f32 %v212, %v227
    %v239 = vadd.f32 %v213, %v229
    %v240 = vadd.f32 %v214, %v231
    %v241 = vadd.f32 %v215, %v233
    %s242 = sld [smem:[#allocation6 + $0x3]]
    %v243 = vstv %s242
    %v244 = vmul.f32 %v151, %v243
    %v245 = vmul.f32 %v152, %v243
    %v246 = vmul.f32 %v153, %v243
    %v247 = vmul.f32 %v154, %v243
    %252 = vrot.lane.b32.xlu0 %v244, 124
    %v253 = vpop.permute.xlu0 %252
    %254 = vrot.lane.b32.xlu0 %v245, 124
    %v255 = vpop.permute.xlu0 %254
    %256 = vrot.lane.b32.xlu0 %v246, 124
    %v257 = vpop.permute.xlu0 %256
    %258 = vrot.lane.b32.xlu0 %v247, 124
    %v259 = vpop.permute.xlu0 %258
    %v264 = vadd.f32 %v238, %v253
    %v265 = vadd.f32 %v239, %v255
    %v266 = vadd.f32 %v240, %v257
    %v267 = vadd.f32 %v241, %v259
    %s268 = sld [smem:[#allocation6 + $0x2]]
    %v269 = vstv %s268
    %v270 = vmul.f32 %v151, %v269
    %v271 = vmul.f32 %v152, %v269
    %v272 = vmul.f32 %v153, %v269
    %v273 = vmul.f32 %v154, %v269
    %278 = vrot.lane.b32.xlu0 %v270, 123
    %v279 = vpop.permute.xlu0 %278
    %280 = vrot.lane.b32.xlu0 %v271, 123
    %v281 = vpop.permute.xlu0 %280
    %282 = vrot.lane.b32.xlu0 %v272, 123
    %v283 = vpop.permute.xlu0 %282
    %284 = vrot.lane.b32.xlu0 %v273, 123
    %v285 = vpop.permute.xlu0 %284
    %v290 = vadd.f32 %v264, %v279
    %v291 = vadd.f32 %v265, %v281
    %v292 = vadd.f32 %v266, %v283
    %v293 = vadd.f32 %v267, %v285
    %s294 = sld [smem:[#allocation6 + $0x1]]
    %v295 = vstv %s294
    %v296 = vmul.f32 %v151, %v295
    %v297 = vmul.f32 %v152, %v295
    %v298 = vmul.f32 %v153, %v295
    %v299 = vmul.f32 %v154, %v295
    %304 = vrot.lane.b32.xlu0 %v296, 122
    %v305 = vpop.permute.xlu0 %304
    %306 = vrot.lane.b32.xlu0 %v297, 122
    %v307 = vpop.permute.xlu0 %306
    %308 = vrot.lane.b32.xlu0 %v298, 122
    %v309 = vpop.permute.xlu0 %308
    %310 = vrot.lane.b32.xlu0 %v299, 122
    %v311 = vpop.permute.xlu0 %310
    %v316 = vadd.f32 %v290, %v305
    %v317 = vadd.f32 %v291, %v307
    %v318 = vadd.f32 %v292, %v309
    %v319 = vadd.f32 %v293, %v311
    %s320 = sld [smem:[#allocation6]]
    %v321 = vstv %s320
    %v322 = vmul.f32 %v151, %v321
    %v323 = vmul.f32 %v152, %v321
    %v324 = vmul.f32 %v153, %v321
    %v325 = vmul.f32 %v154, %v321
    %330 = vrot.lane.b32.xlu0 %v322, 121
    %v331 = vpop.permute.xlu0 %330
    %332 = vrot.lane.b32.xlu0 %v323, 121
    %v333 = vpop.permute.xlu0 %332
    %334 = vrot.lane.b32.xlu0 %v324, 121
    %v335 = vpop.permute.xlu0 %334
    %336 = vrot.lane.b32.xlu0 %v325, 121
    %v337 = vpop.permute.xlu0 %336
    %v342 = vadd.f32 %v316, %v331
    %v343 = vadd.f32 %v317, %v333
    %v344 = vadd.f32 %v318, %v335
    %v345 = vadd.f32 %v319, %v337
    %s346 = sld [smem:[#allocation6 + $0xf]]
    %v347 = vld [vmem:[%s93] sm:$0xff]
    %v348 = vld [vmem:[%s93 + $0x8] sm:$0xff]
    %v349 = vld [vmem:[%s93 + $0x10] sm:$0xff]
    %v350 = vld [vmem:[%s93 + $0x18] sm:$0xff]
    %v351 = vstv %s346
    %v352 = vmul.f32 %v347, %v351
    %v353 = vmul.f32 %v348, %v351
    %v354 = vmul.f32 %v349, %v351
    %v355 = vmul.f32 %v350, %v351
    %v356 = vadd.f32 %v342, %v352
    %v357 = vadd.f32 %v343, %v353
    %v358 = vadd.f32 %v344, %v354
    %v359 = vadd.f32 %v345, %v355
    %s360 = sld [smem:[#allocation6 + $0xe]]
    %v361 = vstv %s360
    %v362 = vmul.f32 %v347, %v361
    %v363 = vmul.f32 %v348, %v361
    %v364 = vmul.f32 %v349, %v361
    %v365 = vmul.f32 %v350, %v361
    %370 = vrot.lane.b32.xlu0 %v362, 127
    %v371 = vpop.permute.xlu0 %370
    %372 = vrot.lane.b32.xlu0 %v363, 127
    %v373 = vpop.permute.xlu0 %372
    %374 = vrot.lane.b32.xlu0 %v364, 127
    %v375 = vpop.permute.xlu0 %374
    %376 = vrot.lane.b32.xlu0 %v365, 127
    %v377 = vpop.permute.xlu0 %376
    %v382 = vadd.f32 %v356, %v371
    %v383 = vadd.f32 %v357, %v373
    %v384 = vadd.f32 %v358, %v375
    %v385 = vadd.f32 %v359, %v377
    %s386 = sld [smem:[#allocation6 + $0xd]]
    %v387 = vstv %s386
    %v388 = vmul.f32 %v347, %v387
    %v389 = vmul.f32 %v348, %v387
    %v390 = vmul.f32 %v349, %v387
    %v391 = vmul.f32 %v350, %v387
    %396 = vrot.lane.b32.xlu0 %v388, 126
    %v397 = vpop.permute.xlu0 %396
    %398 = vrot.lane.b32.xlu0 %v389, 126
    %v399 = vpop.permute.xlu0 %398
    %400 = vrot.lane.b32.xlu0 %v390, 126
    %v401 = vpop.permute.xlu0 %400
    %402 = vrot.lane.b32.xlu0 %v391, 126
    %v403 = vpop.permute.xlu0 %402
    %v408 = vadd.f32 %v382, %v397
    %v409 = vadd.f32 %v383, %v399
    %v410 = vadd.f32 %v384, %v401
    %v411 = vadd.f32 %v385, %v403
    %s412 = sld [smem:[#allocation6 + $0xc]]
    %v413 = vstv %s412
    %v414 = vmul.f32 %v347, %v413
    %v415 = vmul.f32 %v348, %v413
    %v416 = vmul.f32 %v349, %v413
    %v417 = vmul.f32 %v350, %v413
    %422 = vrot.lane.b32.xlu0 %v414, 125
    %v423 = vpop.permute.xlu0 %422
    %424 = vrot.lane.b32.xlu0 %v415, 125
    %v425 = vpop.permute.xlu0 %424
    %426 = vrot.lane.b32.xlu0 %v416, 125
    %v427 = vpop.permute.xlu0 %426
    %428 = vrot.lane.b32.xlu0 %v417, 125
    %v429 = vpop.permute.xlu0 %428
    %v434 = vadd.f32 %v408, %v423
    %v435 = vadd.f32 %v409, %v425
    %v436 = vadd.f32 %v410, %v427
    %v437 = vadd.f32 %v411, %v429
    %s438 = sld [smem:[#allocation6 + $0xb]]
    %v439 = vstv %s438
    %v440 = vmul.f32 %v347, %v439
    %v441 = vmul.f32 %v348, %v439
    %v442 = vmul.f32 %v349, %v439
    %v443 = vmul.f32 %v350, %v439
    %448 = vrot.lane.b32.xlu0 %v440, 124
    %v449 = vpop.permute.xlu0 %448
    %450 = vrot.lane.b32.xlu0 %v441, 124
    %v451 = vpop.permute.xlu0 %450
    %452 = vrot.lane.b32.xlu0 %v442, 124
    %v453 = vpop.permute.xlu0 %452
    %454 = vrot.lane.b32.xlu0 %v443, 124
    %v455 = vpop.permute.xlu0 %454
    %v460 = vadd.f32 %v434, %v449
    %v461 = vadd.f32 %v435, %v451
    %v462 = vadd.f32 %v436, %v453
    %v463 = vadd.f32 %v437, %v455
    %s464 = sld [smem:[#allocation6 + $0xa]]
    %v465 = vstv %s464
    %v466 = vmul.f32 %v347, %v465
    %v467 = vmul.f32 %v348, %v465
    %v468 = vmul.f32 %v349, %v465
    %v469 = vmul.f32 %v350, %v465
    %474 = vrot.lane.b32.xlu0 %v466, 123
    %v475 = vpop.permute.xlu0 %474
    %476 = vrot.lane.b32.xlu0 %v467, 123
    %v477 = vpop.permute.xlu0 %476
    %478 = vrot.lane.b32.xlu0 %v468, 123
    %v479 = vpop.permute.xlu0 %478
    %480 = vrot.lane.b32.xlu0 %v469, 123
    %v481 = vpop.permute.xlu0 %480
    %v486 = vadd.f32 %v460, %v475
    %v487 = vadd.f32 %v461, %v477
    %v488 = vadd.f32 %v462, %v479
    %v489 = vadd.f32 %v463, %v481
    %s490 = sld [smem:[#allocation6 + $0x9]]
    %v491 = vstv %s490
    %v492 = vmul.f32 %v347, %v491
    %v493 = vmul.f32 %v348, %v491
    %v494 = vmul.f32 %v349, %v491
    %v495 = vmul.f32 %v350, %v491
    %500 = vrot.lane.b32.xlu0 %v492, 122
    %v501 = vpop.permute.xlu0 %500
    %502 = vrot.lane.b32.xlu0 %v493, 122
    %v503 = vpop.permute.xlu0 %502
    %504 = vrot.lane.b32.xlu0 %v494, 122
    %v505 = vpop.permute.xlu0 %504
    %506 = vrot.lane.b32.xlu0 %v495, 122
    %v507 = vpop.permute.xlu0 %506
    %v512 = vadd.f32 %v486, %v501
    %v513 = vadd.f32 %v487, %v503
    %v514 = vadd.f32 %v488, %v505
    %v515 = vadd.f32 %v489, %v507
    %s516 = sld [smem:[#allocation6 + $0x8]]
    %v517 = vstv %s516
    %v518 = vmul.f32 %v347, %v517
    %v519 = vmul.f32 %v348, %v517
    %v520 = vmul.f32 %v349, %v517
    %v521 = vmul.f32 %v350, %v517
    %526 = vrot.lane.b32.xlu0 %v518, 121
    %v527 = vpop.permute.xlu0 %526
    %528 = vrot.lane.b32.xlu0 %v519, 121
    %v529 = vpop.permute.xlu0 %528
    %530 = vrot.lane.b32.xlu0 %v520, 121
    %v531 = vpop.permute.xlu0 %530
    %532 = vrot.lane.b32.xlu0 %v521, 121
    %v533 = vpop.permute.xlu0 %532
    %v538 = vadd.f32 %v512, %v527
    %v539 = vadd.f32 %v513, %v529
    %v540 = vadd.f32 %v514, %v531
    %v541 = vadd.f32 %v515, %v533
    %s542 = sld [smem:[#allocation6 + $0x17]]
    %v543 = vld [vmem:[%s107] sm:$0xff]
    %v544 = vld [vmem:[%s107 + $0x8] sm:$0xff]
    %v545 = vld [vmem:[%s107 + $0x10] sm:$0xff]
    %v546 = vld [vmem:[%s107 + $0x18] sm:$0xff]
    %v547 = vstv %s542
    %v548 = vmul.f32 %v543, %v547
    %v549 = vmul.f32 %v544, %v547
    %v550 = vmul.f32 %v545, %v547
    %v551 = vmul.f32 %v546, %v547
    %v552 = vadd.f32 %v538, %v548
    %v553 = vadd.f32 %v539, %v549
    %v554 = vadd.f32 %v540, %v550
    %v555 = vadd.f32 %v541, %v551
    %s556 = sld [smem:[#allocation6 + $0x16]]
    %v557 = vstv %s556
    %v558 = vmul.f32 %v543, %v557
    %v559 = vmul.f32 %v544, %v557
    %v560 = vmul.f32 %v545, %v557
    %v561 = vmul.f32 %v546, %v557
    %566 = vrot.lane.b32.xlu0 %v558, 127
    %v567 = vpop.permute.xlu0 %566
    %568 = vrot.lane.b32.xlu0 %v559, 127
    %v569 = vpop.permute.xlu0 %568
    %570 = vrot.lane.b32.xlu0 %v560, 127
    %v571 = vpop.permute.xlu0 %570
    %572 = vrot.lane.b32.xlu0 %v561, 127
    %v573 = vpop.permute.xlu0 %572
    %v578 = vadd.f32 %v552, %v567
    %v579 = vadd.f32 %v553, %v569
    %v580 = vadd.f32 %v554, %v571
    %v581 = vadd.f32 %v555, %v573
    %s582 = sld [smem:[#allocation6 + $0x15]]
    %v583 = vstv %s582
    %v584 = vmul.f32 %v543, %v583
    %v585 = vmul.f32 %v544, %v583
    %v586 = vmul.f32 %v545, %v583
    %v587 = vmul.f32 %v546, %v583
    %592 = vrot.lane.b32.xlu0 %v584, 126
    %v593 = vpop.permute.xlu0 %592
    %594 = vrot.lane.b32.xlu0 %v585, 126
    %v595 = vpop.permute.xlu0 %594
    %596 = vrot.lane.b32.xlu0 %v586, 126
    %v597 = vpop.permute.xlu0 %596
    %598 = vrot.lane.b32.xlu0 %v587, 126
    %v599 = vpop.permute.xlu0 %598
    %v604 = vadd.f32 %v578, %v593
    %v605 = vadd.f32 %v579, %v595
    %v606 = vadd.f32 %v580, %v597
    %v607 = vadd.f32 %v581, %v599
    %s608 = sld [smem:[#allocation6 + $0x14]]
    %v609 = vstv %s608
    %v610 = vmul.f32 %v543, %v609
    %v611 = vmul.f32 %v544, %v609
    %v612 = vmul.f32 %v545, %v609
    %v613 = vmul.f32 %v546, %v609
    %618 = vrot.lane.b32.xlu0 %v610, 125
    %v619 = vpop.permute.xlu0 %618
    %620 = vrot.lane.b32.xlu0 %v611, 125
    %v621 = vpop.permute.xlu0 %620
    %622 = vrot.lane.b32.xlu0 %v612, 125
    %v623 = vpop.permute.xlu0 %622
    %624 = vrot.lane.b32.xlu0 %v613, 125
    %v625 = vpop.permute.xlu0 %624
    %v630 = vadd.f32 %v604, %v619
    %v631 = vadd.f32 %v605, %v621
    %v632 = vadd.f32 %v606, %v623
    %v633 = vadd.f32 %v607, %v625
    %s634 = sld [smem:[#allocation6 + $0x13]]
    %v635 = vstv %s634
    %v636 = vmul.f32 %v543, %v635
    %v637 = vmul.f32 %v544, %v635
    %v638 = vmul.f32 %v545, %v635
    %v639 = vmul.f32 %v546, %v635
    %644 = vrot.lane.b32.xlu0 %v636, 124
    %v645 = vpop.permute.xlu0 %644
    %646 = vrot.lane.b32.xlu0 %v637, 124
    %v647 = vpop.permute.xlu0 %646
    %648 = vrot.lane.b32.xlu0 %v638, 124
    %v649 = vpop.permute.xlu0 %648
    %650 = vrot.lane.b32.xlu0 %v639, 124
    %v651 = vpop.permute.xlu0 %650
    %v656 = vadd.f32 %v630, %v645
    %v657 = vadd.f32 %v631, %v647
    %v658 = vadd.f32 %v632, %v649
    %v659 = vadd.f32 %v633, %v651
    %s660 = sld [smem:[#allocation6 + $0x12]]
    %v661 = vstv %s660
    %v662 = vmul.f32 %v543, %v661
    %v663 = vmul.f32 %v544, %v661
    %v664 = vmul.f32 %v545, %v661
    %v665 = vmul.f32 %v546, %v661
    %670 = vrot.lane.b32.xlu0 %v662, 123
    %v671 = vpop.permute.xlu0 %670
    %672 = vrot.lane.b32.xlu0 %v663, 123
    %v673 = vpop.permute.xlu0 %672
    %674 = vrot.lane.b32.xlu0 %v664, 123
    %v675 = vpop.permute.xlu0 %674
    %676 = vrot.lane.b32.xlu0 %v665, 123
    %v677 = vpop.permute.xlu0 %676
    %v682 = vadd.f32 %v656, %v671
    %v683 = vadd.f32 %v657, %v673
    %v684 = vadd.f32 %v658, %v675
    %v685 = vadd.f32 %v659, %v677
    %s686 = sld [smem:[#allocation6 + $0x11]]
    %v687 = vstv %s686
    %v688 = vmul.f32 %v543, %v687
    %v689 = vmul.f32 %v544, %v687
    %v690 = vmul.f32 %v545, %v687
    %v691 = vmul.f32 %v546, %v687
    %696 = vrot.lane.b32.xlu0 %v688, 122
    %v697 = vpop.permute.xlu0 %696
    %698 = vrot.lane.b32.xlu0 %v689, 122
    %v699 = vpop.permute.xlu0 %698
    %700 = vrot.lane.b32.xlu0 %v690, 122
    %v701 = vpop.permute.xlu0 %700
    %702 = vrot.lane.b32.xlu0 %v691, 122
    %v703 = vpop.permute.xlu0 %702
    %v708 = vadd.f32 %v682, %v697
    %v709 = vadd.f32 %v683, %v699
    %v710 = vadd.f32 %v684, %v701
    %v711 = vadd.f32 %v685, %v703
    %s712 = sld [smem:[#allocation6 + $0x10]]
    %v713 = vstv %s712
    %v714 = vmul.f32 %v543, %v713
    %v715 = vmul.f32 %v544, %v713
    %v716 = vmul.f32 %v545, %v713
    %v717 = vmul.f32 %v546, %v713
    %722 = vrot.lane.b32.xlu0 %v714, 121
    %v723 = vpop.permute.xlu0 %722
    %724 = vrot.lane.b32.xlu0 %v715, 121
    %v725 = vpop.permute.xlu0 %724
    %726 = vrot.lane.b32.xlu0 %v716, 121
    %v727 = vpop.permute.xlu0 %726
    %728 = vrot.lane.b32.xlu0 %v717, 121
    %v729 = vpop.permute.xlu0 %728
    %v734 = vadd.f32 %v708, %v723
    %v735 = vadd.f32 %v709, %v725
    %v736 = vadd.f32 %v710, %v727
    %v737 = vadd.f32 %v711, %v729
    %vm738 = vcmask 187392
    %739 = vst.msk [vmem:[%s3] sm:$0xff] %vm738, %v734
    %740 = vst.msk [vmem:[%s3 + $0x8] sm:$0xff] %vm738, %v735
    %741 = vst.msk [vmem:[%s3 + $0x10] sm:$0xff] %vm738, %v736
    %742 = vst.msk [vmem:[%s3 + $0x18] sm:$0xff] %vm738, %v737
    // Predicated region
    $region26: #{tpu_custom_call.1} parent=1 // pred_check
      _
    $region27: #{tpu_custom_call.1} parent=1 // pred_check_branch
      %744 = sbr.rel (0) target = $region29
    $region28: #{tpu_custom_call.1} parent=1 // pred_region
      _
    $region29: #{tpu_custom_call.1} parent=1 // pred_fallthru
      _
    // Predicated region
    $region30: #{tpu_custom_call.1} parent=1 // pred_check
      _
    $region31: #{tpu_custom_call.1} parent=1 // pred_check_branch
      %746 = sbr.rel (0) target = $region33
    $region32: #{tpu_custom_call.1} parent=1 // pred_region
      _
    $region33: #{tpu_custom_call.1} parent=1 // pred_fallthru
      _
    %747 = vsyncpa [#allocation4], 1
    %748 = vsyncpa [#allocation5], 1
    %749 = vsyncpa [#allocation8], 1

</llo_original>
